<compile_context>
chip_gen: v7x
topology: tpu7x:2x2x1
jax: 0.10.0
libtpu: 0.0.40
codegen_flags: <defaults>
</compile_context>

<pallas_src>
import numpy as np
import jax
import jax.numpy as jnp
from jax.experimental import pallas as pl
from jax.experimental.pallas import tpu as pltpu

GAUSS = (0.05, 0.25, 0.4, 0.25, 0.05)   # 1-D gaussian taps (outer product -> 5x5)
EPS = 1e-3                              # CharbonnierLoss eps

_MAX_KRON_HW = 1024                     # Kronecker path: (HW,HW) bf16 weight <= 2 MiB
_LIVE_BUDGET = 24 * 1024 * 1024         # target live VMEM bytes per grid step
_VMEM_LIMIT = 48 * 1024 * 1024          # scoped limit: > v5e 16 MiB default, < v7x 64 MiB phys


# ----------------------------- host-side weights -----------------------------
def _gauss_matrix(n: int) -> np.ndarray:
    """A[i, k] = sum_a GAUSS[a] * [clip(i + a - 2, 0, n-1) == k] (replicate pad)."""
    idx = np.arange(n)
    a_mat = np.zeros((n, n), dtype=np.float64)
    for a, w in enumerate(GAUSS):
        src = np.clip(idx + a - 2, 0, n - 1)
        np.add.at(a_mat, (idx, src), w)
    return a_mat


def _folded_matrices(h: int, w: int):
    """B_H, B_Wt (float64) such that conv(mask4 * conv(e)) == B_H @ e @ B_Wt."""
    ah = _gauss_matrix(h)
    aw = _gauss_matrix(w)
    mh = np.diag((np.arange(h) % 2 == 0).astype(np.float64))
    mw = np.diag((np.arange(w) % 2 == 0).astype(np.float64))
    bh = 2.0 * ah @ mh @ ah            # left factor  (H, H)
    bwt = 2.0 * aw.T @ mw @ aw.T       # right factor (W, W)
    return bh, bwt


# --------------------------------- kernels -----------------------------------
def _kron_kernel(x_ref, y_ref, m_ref, out_ref):
    """Small-image path: e (P, HW) lane-dense; s = e @ Mt in ONE matmul."""
    e = x_ref[...].astype(jnp.float32) - y_ref[...].astype(jnp.float32)   # (P, HW)
    s = jnp.dot(e.astype(jnp.bfloat16), m_ref[...],
                preferred_element_type=jnp.float32)                      # (P, HW)
    d = e - s                                       # = laplacian(x) - laplacian(y)
    charb = jnp.sqrt(d * d + jnp.float32(EPS * EPS))
    out_ref[...] = jnp.broadcast_to(jnp.sum(charb), out_ref.shape)


def _sep_kernel(x_ref, y_ref, bwt_ref, bht_ref, out_ref):
    """Large-image path: two tall 2-D matmuls with resident (W,W)/(H,H) weights."""
    e = x_ref[...].astype(jnp.float32) - y_ref[...].astype(jnp.float32)   # (P, H, W)
    p, h, w = e.shape
    # W-side fold: t[p,h,:] = e[p,h,:] @ B_Wt  as one (P*H, W) @ (W, W) matmul.
    t = jnp.dot(e.reshape(p * h, w).astype(jnp.bfloat16), bwt_ref[...],
                preferred_element_type=jnp.float32)                      # (P*H, W)
    # H-side fold: transpose last two dims (XLU) -> one (P*W, H) @ (H, H) matmul
    # against B_H^T; result is s in (P, W, H) layout.
    t_t = jnp.swapaxes(t.reshape(p, h, w), -1, -2)                       # (P, W, H)
    s_t = jnp.dot(t_t.reshape(p * w, h).astype(jnp.bfloat16), bht_ref[...],
                  preferred_element_type=jnp.float32)                    # (P*W, H)
    e_t = jnp.swapaxes(e, -1, -2)                                        # (P, W, H)
    d = e_t - s_t.reshape(p, w, h)      # transposed layout; sum is layout-invariant
    charb = jnp.sqrt(d * d + jnp.float32(EPS * EPS))
    out_ref[...] = jnp.broadcast_to(jnp.sum(charb), out_ref.shape)


# -------------------------------- wrapper -------------------------------------
def _divisors(n):
    return [d for d in range(1, n + 1) if n % d == 0]


def _pick_planes_per_step(planes, live_bytes_per_plane, budget, sublane_aligned):
    """Largest divisor of `planes` whose live-VMEM estimate fits `budget`.

    If `sublane_aligned`, P is the second-to-last dim of a 2-D block, so it must
    be a multiple of 8 or equal to `planes` ((8,128) tiling rule).  When the
    full-planes block fits, prefer an equally-legal G=2 split so dual-TC parts
    (v7x) shard the "parallel" grid axis across both TensorCores.
    """
    cands = [p for p in _divisors(planes)
             if (not sublane_aligned) or p % 8 == 0 or p == planes]
    fitting = [p for p in cands if p * live_bytes_per_plane <= budget]
    P = max(fitting) if fitting else min(cands)
    if P == planes and planes % 2 == 0:
        half = planes // 2
        if half in cands and half * live_bytes_per_plane <= budget:
            P = half
    return P


def edge_loss(x: jnp.ndarray, y: jnp.ndarray) -> jnp.ndarray:
    """EdgeLoss.forward(x, y). x, y: (N, C, H, W)."""
    n, c, h, w = x.shape
    planes = n * c
    hw = h * w

    compiler_params = pltpu.CompilerParams(
        dimension_semantics=("parallel",),        # each step writes its own block
        vmem_limit_bytes=_VMEM_LIMIT)

    if hw <= _MAX_KRON_HW:
        # ---- small images: lane-dense (planes, H*W) layout, single matmul ----
        bh, bwt = _folded_matrices(h, w)
        # Row-major vec identity: vec(B_H e B_Wt) = kron(B_H, B_Wt^T) vec(e),
        # so for plane-rows E (planes, HW):  S = E @ Mt with Mt = kron(B_H^T, B_Wt).
        mt = jnp.asarray(np.kron(bh.T, bwt), dtype=jnp.bfloat16)          # (HW, HW)
        xs = x.reshape(planes, hw)
        ys = y.reshape(planes, hw)

        weight_bytes = 2 * hw * hw * 2            # bf16, double-buffered
        live_per_plane = 34 * hw                  # 2 ins x 2 bufs (f32) + e/e_bf16/s/d/charb
        P = _pick_planes_per_step(planes, live_per_plane,
                                  _LIVE_BUDGET - weight_bytes, sublane_aligned=True)
        G = planes // P

        partials = pl.pallas_call(
            _kron_kernel,
            out_shape=jax.ShapeDtypeStruct((G, 8, 128), jnp.float32),
            grid_spec=pltpu.PrefetchScalarGridSpec(
                num_scalar_prefetch=0,
                grid=(G,),
                in_specs=[
                    pl.BlockSpec((P, hw), lambda g: (g, 0)),
                    pl.BlockSpec((P, hw), lambda g: (g, 0)),
                    pl.BlockSpec((hw, hw), lambda g: (0, 0)),   # resident weights
                ],
                out_specs=pl.BlockSpec((1, 8, 128), lambda g: (g, 0, 0)),
            ),
            compiler_params=compiler_params,
        )(xs, ys, mt)
    else:
        # ---- large images: separable two-matmul path (W, H assumed >= 128) ----
        bh_np, bwt_np = _folded_matrices(h, w)
        bwt = jnp.asarray(bwt_np, dtype=jnp.bfloat16)     # (W, W) right factor
        bht = jnp.asarray(bh_np.T, dtype=jnp.bfloat16)    # (H, H) = B_H^T
        xs = x.reshape(planes, h, w)
        ys = y.reshape(planes, h, w)

        weight_bytes = 2 * 2 * (h * h + w * w)            # bf16, double-buffered
        live_per_plane = 48 * hw                          # 2x2 input bufs + intermediates
        P = _pick_planes_per_step(planes, live_per_plane,
                                  max(_LIVE_BUDGET - weight_bytes, 0),
                                  sublane_aligned=False)  # (H, W) are full dims
        G = planes // P

        partials = pl.pallas_call(
            _sep_kernel,
            out_shape=jax.ShapeDtypeStruct((G, 8, 128), jnp.float32),
            grid_spec=pltpu.PrefetchScalarGridSpec(
                num_scalar_prefetch=0,
                grid=(G,),
                in_specs=[
                    pl.BlockSpec((P, h, w), lambda g: (g, 0, 0)),
                    pl.BlockSpec((P, h, w), lambda g: (g, 0, 0)),
                    pl.BlockSpec((w, w), lambda g: (0, 0)),     # resident weights
                    pl.BlockSpec((h, h), lambda g: (0, 0)),
                ],
                out_specs=pl.BlockSpec((1, 8, 128), lambda g: (g, 0, 0)),
            ),
            compiler_params=compiler_params,
        )(xs, ys, bwt, bht)

    total = jnp.sum(partials[:, 0, 0])
    return total / (planes * hw)


# ---------------- pure-JAX reference (for correctness check) ----------------
def _ref_conv_gauss(img, kern):
    p = jnp.pad(img, ((0, 0), (0, 0), (2, 2), (2, 2)), mode="edge")
    return jax.lax.conv_general_dilated(
        p, kern, window_strides=(1, 1), padding="VALID",
        dimension_numbers=("NCHW", "OIHW", "NCHW"),
        feature_group_count=img.shape[1])


def _ref_laplacian(img, kern):
    f = _ref_conv_gauss(img, kern)
    nf = jnp.zeros_like(f).at[:, :, ::2, ::2].set(f[:, :, ::2, ::2] * 4.0)
    return img - _ref_conv_gauss(nf, kern)


def _ref_edge_loss(x, y):
    k = jnp.asarray([GAUSS], dtype=jnp.float32)            # (1, 5)
    kern2d = k.T @ k                                        # (5, 5)
    kern = jnp.tile(kern2d[None, None], (x.shape[1], 1, 1, 1))
    d = _ref_laplacian(x, kern) - _ref_laplacian(y, kern)
    return jnp.mean(jnp.sqrt(d * d + EPS * EPS))


if __name__ == "__main__":
    key = jax.random.PRNGKey(0)
    kx, ky = jax.random.split(key)

    # Module hardcodes 3 channels (depthwise 5x5 kernel repeated 3x, groups=3).
    # Small-image (lane-dense Kronecker) path.
    b, c, h, w = 2, 3, 16, 16
    x = jax.random.normal(kx, (b, c, h, w), dtype=jnp.float32)
    y = jax.random.normal(ky, (b, c, h, w), dtype=jnp.float32)
    loss = jax.block_until_ready(edge_loss(x, y))
    ref = jax.block_until_ready(_ref_edge_loss(x, y))
    # bf16 MXU operands change rounding slightly; loss-level tolerance.
    assert jnp.allclose(loss, ref, rtol=2e-2, atol=1e-3), (float(loss), float(ref))

    # Large-image (separable two-matmul) path; also exercises the G=2 split.
    b2, c2, h2, w2 = 2, 3, 128, 128
    x2 = jax.random.normal(kx, (b2, c2, h2, w2), dtype=jnp.float32)
    y2 = jax.random.normal(ky, (b2, c2, h2, w2), dtype=jnp.float32)
    loss2 = jax.block_until_ready(edge_loss(x2, y2))
    ref2 = jax.block_until_ready(_ref_edge_loss(x2, y2))
    assert jnp.allclose(loss2, ref2, rtol=2e-2, atol=1e-3), (float(loss2), float(ref2))

    print("KERNEL_OK")
</pallas_src>

<mosaic_0001>
module attributes {stable_mosaic.version = 11 : i64} {
  func.func @_kron_kernel(%arg0: i32, %arg1: memref<6x256xf32, #tpu.memory_space<vmem>>, %arg2: memref<6x256xf32, #tpu.memory_space<vmem>>, %arg3: memref<256x256xbf16, #tpu.memory_space<vmem>>, %arg4: memref<1x8x128xf32, #tpu.memory_space<vmem>>) attributes {dimension_semantics = [#tpu.dimension_semantics<parallel>], iteration_bounds = array<i64: 1>, scalar_prefetch = 0 : i64, scratch_operands = 0 : i64, tpu.core_type = #tpu.core_type<tc>, window_params = [{transform_indices = @transform_0, window_bounds = array<i64: 6, 256>}, {transform_indices = @transform_1, window_bounds = array<i64: 6, 256>}, {pipeline_mode = #tpu.pipeline_mode<synchronous>, transform_indices = @transform_2, window_bounds = array<i64: 256, 256>}, {transform_indices = @transform_3, window_bounds = array<i64: 1, 8, 128>}]} {
    %c0 = arith.constant 0 : index
    %c0_0 = arith.constant 0 : index
    %0 = vector.load %arg1[%c0, %c0_0] : memref<6x256xf32, #tpu.memory_space<vmem>>, vector<6x256xf32>
    %c0_1 = arith.constant 0 : index
    %c0_2 = arith.constant 0 : index
    %1 = vector.load %arg2[%c0_1, %c0_2] : memref<6x256xf32, #tpu.memory_space<vmem>>, vector<6x256xf32>
    %2 = arith.subf %0, %1 : vector<6x256xf32>
    %3 = arith.truncf %2 : vector<6x256xf32> to vector<6x256xbf16>
    %c0_3 = arith.constant 0 : index
    %c0_4 = arith.constant 0 : index
    %4 = vector.load %arg3[%c0_3, %c0_4] : memref<256x256xbf16, #tpu.memory_space<vmem>>, vector<256x256xbf16>
    %cst = arith.constant dense<0.000000e+00> : vector<6x256xf32>
    %5 = tpu.matmul %3, %4, %cst {dimension_numbers = #tpu.dot_dimension_numbers<[1], [0], [0], [1], [0, 0, 1, 1], [], []>} : vector<6x256xbf16>, vector<256x256xbf16>, vector<6x256xf32> -> vector<6x256xf32>
    %6 = arith.subf %2, %5 : vector<6x256xf32>
    %7 = arith.mulf %6, %6 : vector<6x256xf32>
    %cst_5 = arith.constant 9.99999997E-7 : f32
    %8 = vector.broadcast %cst_5 : f32 to vector<6x256xf32>
    %9 = arith.addf %7, %8 : vector<6x256xf32>
    %10 = math.sqrt %9 : vector<6x256xf32>
    %11 = vector.shape_cast %10 : vector<6x256xf32> to vector<1x6x256xf32>
    %cst_6 = arith.constant dense<0.000000e+00> : vector<1xf32>
    %12 = vector.multi_reduction <add>, %11, %cst_6 [1, 2] : vector<1x6x256xf32> to vector<1xf32>
    %13 = vector.shape_cast %12 : vector<1xf32> to vector<1x1x1xf32>
    %14 = vector.extract %13[0, 0, 0] : f32 from vector<1x1x1xf32>
    %15 = vector.broadcast %14 : f32 to vector<1x8x128xf32>
    %c0_7 = arith.constant 0 : index
    %c0_8 = arith.constant 0 : index
    %c0_9 = arith.constant 0 : index
    %16 = vector.load %arg4[%c0_7, %c0_8, %c0_9] : memref<1x8x128xf32, #tpu.memory_space<vmem>>, vector<1x8x128xf32>
    tpu.vector_store %arg4[%c0_7, %c0_8, %c0_9], %15 {strides = array<i32>} : memref<1x8x128xf32, #tpu.memory_space<vmem>>, vector<1x8x128xf32>,
    return
  }
  func.func @transform_0(%arg0: i32) -> (i32, i32) {
    %c0_i32 = arith.constant 0 : i32
    %c0_i32_0 = arith.constant 0 : i32
    return %arg0, %c0_i32 : i32, i32
  }
  func.func @transform_1(%arg0: i32) -> (i32, i32) {
    %c0_i32 = arith.constant 0 : i32
    %c0_i32_0 = arith.constant 0 : i32
    return %arg0, %c0_i32 : i32, i32
  }
  func.func @transform_2(%arg0: i32) -> (i32, i32) {
    %c0_i32 = arith.constant 0 : i32
    %c0_i32_0 = arith.constant 0 : i32
    %c0_i32_1 = arith.constant 0 : i32
    return %c0_i32, %c0_i32_0 : i32, i32
  }
  func.func @transform_3(%arg0: i32) -> (i32, i32, i32) {
    %c0_i32 = arith.constant 0 : i32
    %c0_i32_0 = arith.constant 0 : i32
    %c0_i32_1 = arith.constant 0 : i32
    return %arg0, %c0_i32, %c0_i32_0 : i32, i32, i32
  }
}

</mosaic_0001>

<llo_original>
// kernel: tpu_custom_call.1
$region0: #{tpu_custom_call.1}
  #allocation0 [shape = 'u32[]', space=smem, size = 0x4, offset = 0x4, fixed_abs, tag = 'smem constant byte address 0x4 - core index']
  #allocation1 [shape = 'u32[144,128]{1,0:T(1,128)}', space=vmem, size = 0x12000, scoped, tag = 'internal scratch']
  %s0 = inlined_call_operand.hbm [shape: f32[6,256], index: 0, kind: input, shape index: {}]
  %s1 = inlined_call_operand.hbm [shape: f32[6,256], index: 1, kind: input, shape index: {}]
  %s2 = inlined_call_operand.hbm [shape: bf16[256,256], index: 2, kind: input, shape index: {}]
  %s3 = inlined_call_operand.hbm [shape: f32[1,8,128], index: 3, kind: output, shape index: {}]
  %s4 = sld [smem:[#allocation0]]
  $region34: #{tpu_custom_call.1} parent=0
    _
  %s6 = ssub.s32 1, %s4
  %s7 = scalar_select 0, %s6, %s4
  $region1: #{tpu_custom_call.1} parent=0
    #allocation2 [shape = 'u8[8192]{0}', space=vmem, size = 0x2000, scoped, tag = 'input window, operand 0, single buffered']
    #allocation3 [shape = 's32[1]{0}', space=sflag, size = 0x4, scoped, tag = 'scoped memory for tpu_custom_call.1']
    #allocation4 [shape = 's32[1]{0}', space=sflag, size = 0x4, scoped, tag = 'scoped memory for tpu_custom_call.1']
    #allocation5 [shape = 'u8[8192]{0}', space=vmem, size = 0x2000, scoped, tag = 'input window, operand 1, single buffered']
    #allocation6 [shape = 's32[1]{0}', space=sflag, size = 0x4, scoped, tag = 'scoped memory for tpu_custom_call.1']
    #allocation7 [shape = 'u8[131072]{0}', space=vmem, size = 0x20000, scoped, tag = 'input window, operand 2, single buffered']
    #allocation8 [shape = 'u8[4096]{0}', space=vmem, size = 0x1000, scoped, tag = 'output window, operand 0, single buffered']
    %8 = vsyncpa [#allocation3], 0
    %9 = vsyncpa [#allocation6], 0
    %10 = vsyncpa [#allocation4], 0
    // Predicated region
    $region2: #{tpu_custom_call.1} parent=1 // pred_check
      _
    $region3: #{tpu_custom_call.1} parent=1 // pred_check_branch
      %12 = sbr.rel (0) target = $region5
    $region4: #{tpu_custom_call.1} parent=1 // pred_region
      %s14 = ssub.s32 256, 256
      %15 = vsyncadd [#allocation3], %s14
      %s17 = sshll.u32 [#allocation2], 4
      %s18 = int_to_ptr.vmem [resolvable:$true] %s17
      %20 = dma.hbm_to_vmem [thread:$0]  %s0, 256, %s18, [#allocation3]
    $region5: #{tpu_custom_call.1} parent=1 // pred_fallthru
      _
    // Predicated region
    $region6: #{tpu_custom_call.1} parent=1 // pred_check
      _
    $region7: #{tpu_custom_call.1} parent=1 // pred_check_branch
      %22 = sbr.rel (0) target = $region9
    $region8: #{tpu_custom_call.1} parent=1 // pred_region
      %s24 = ssub.s32 256, 256
      %25 = vsyncadd [#allocation6], %s24
      %s27 = sshll.u32 [#allocation5], 4
      %s28 = int_to_ptr.vmem [resolvable:$true] %s27
      %30 = dma.hbm_to_vmem [thread:$0]  %s1, 256, %s28, [#allocation6]
    $region9: #{tpu_custom_call.1} parent=1 // pred_fallthru
      _
    // Predicated region
    $region10: #{tpu_custom_call.1} parent=1 // pred_check
      _
    $region11: #{tpu_custom_call.1} parent=1 // pred_check_branch
      %32 = sbr.rel (0) target = $region13
    $region12: #{tpu_custom_call.1} parent=1 // pred_region
      %s34 = ssub.s32 4096, 4096
      %35 = vsyncadd [#allocation6], %s34
      %s36 = sshll.u32 [#allocation7], 4
      %s37 = int_to_ptr.vmem [resolvable:$true] %s36
      %42 = dma.hbm_to_vmem [thread:$0]  %s2, 4096, %s37, [#allocation6], 128, 128, 8
    $region13: #{tpu_custom_call.1} parent=1 // pred_fallthru
      _
    // Predicated region
    $region14: #{tpu_custom_call.1} parent=1 // pred_check
      _
    $region15: #{tpu_custom_call.1} parent=1 // pred_check_branch
      %44 = sbr.rel (0) target = $region17
    $region16: #{tpu_custom_call.1} parent=1 // pred_region
      %45 = dma.done [#allocation3], 256
    $region17: #{tpu_custom_call.1} parent=1 // pred_fallthru
      _
    // Predicated region
    $region18: #{tpu_custom_call.1} parent=1 // pred_check
      _
    $region19: #{tpu_custom_call.1} parent=1 // pred_check_branch
      %47 = sbr.rel (0) target = $region21
    $region20: #{tpu_custom_call.1} parent=1 // pred_region
      %48 = dma.done [#allocation6], 256
    $region21: #{tpu_custom_call.1} parent=1 // pred_fallthru
      _
    // Predicated region
    $region22: #{tpu_custom_call.1} parent=1 // pred_check
      _
    $region23: #{tpu_custom_call.1} parent=1 // pred_check_branch
      %50 = sbr.rel (0) target = $region25
    $region24: #{tpu_custom_call.1} parent=1 // pred_region
      %51 = dma.done [#allocation6], 4096
    $region25: #{tpu_custom_call.1} parent=1 // pred_fallthru
      _
    %v52 = vld [vmem:[#allocation2] sm:$0x3f]
    %v53 = vld [vmem:[#allocation2 + $0x8] sm:$0x3f]
    %v54 = vld [vmem:[#allocation5] sm:$0x3f]
    %v55 = vld [vmem:[#allocation5 + $0x8] sm:$0x3f]
    %v56 = vsub.f32 %v52, %v54
    %v57 = vsub.f32 %v53, %v55
    %v58 = vpack.c.bf16 %v56, %v56
    %v59 = vpack.c.bf16 %v57, %v57
    %v60 = vld [vmem:[#allocation7] sm:$0xff]
    %v61 = vld [vmem:[#allocation7 + $0x8] sm:$0xff]
    %v62 = vld [vmem:[#allocation7 + $0x10] sm:$0xff]
    %v63 = vld [vmem:[#allocation7 + $0x18] sm:$0xff]
    %v64 = vld [vmem:[#allocation7 + $0x20] sm:$0xff]
    %v65 = vld [vmem:[#allocation7 + $0x28] sm:$0xff]
    %v66 = vld [vmem:[#allocation7 + $0x30] sm:$0xff]
    %v67 = vld [vmem:[#allocation7 + $0x38] sm:$0xff]
    %v68 = vld [vmem:[#allocation7 + $0x40] sm:$0xff]
    %v69 = vld [vmem:[#allocation7 + $0x48] sm:$0xff]
    %v70 = vld [vmem:[#allocation7 + $0x50] sm:$0xff]
    %v71 = vld [vmem:[#allocation7 + $0x58] sm:$0xff]
    %v72 = vld [vmem:[#allocation7 + $0x60] sm:$0xff]
    %v73 = vld [vmem:[#allocation7 + $0x68] sm:$0xff]
    %v74 = vld [vmem:[#allocation7 + $0x70] sm:$0xff]
    %v75 = vld [vmem:[#allocation7 + $0x78] sm:$0xff]
    %v76 = vld [vmem:[#allocation7 + $0x80] sm:$0xff]
    %v77 = vld [vmem:[#allocation7 + $0x88] sm:$0xff]
    %v78 = vld [vmem:[#allocation7 + $0x90] sm:$0xff]
    %v79 = vld [vmem:[#allocation7 + $0x98] sm:$0xff]
    %v80 = vld [vmem:[#allocation7 + $0xa0] sm:$0xff]
    %v81 = vld [vmem:[#allocation7 + $0xa8] sm:$0xff]
    %v82 = vld [vmem:[#allocation7 + $0xb0] sm:$0xff]
    %v83 = vld [vmem:[#allocation7 + $0xb8] sm:$0xff]
    %v84 = vld [vmem:[#allocation7 + $0xc0] sm:$0xff]
    %v85 = vld [vmem:[#allocation7 + $0xc8] sm:$0xff]
    %v86 = vld [vmem:[#allocation7 + $0xd0] sm:$0xff]
    %v87 = vld [vmem:[#allocation7 + $0xd8] sm:$0xff]
    %v88 = vld [vmem:[#allocation7 + $0xe0] sm:$0xff]
    %v89 = vld [vmem:[#allocation7 + $0xe8] sm:$0xff]
    %v90 = vld [vmem:[#allocation7 + $0xf0] sm:$0xff]
    %v91 = vld [vmem:[#allocation7 + $0xf8] sm:$0xff]
    %v124 = vunpack.c.l.b16 %v60
    %v125 = vunpack.c.h.b16 %v60
    %v126 = vunpack.c.l.b16 %v61
    %v127 = vunpack.c.h.b16 %v61
    %v128 = vunpack.c.l.b16 %v62
    %v129 = vunpack.c.h.b16 %v62
    %v130 = vunpack.c.l.b16 %v63
    %v131 = vunpack.c.h.b16 %v63
    %v132 = vunpack.c.l.b16 %v64
    %v133 = vunpack.c.h.b16 %v64
    %v134 = vunpack.c.l.b16 %v65
    %v135 = vunpack.c.h.b16 %v65
    %v136 = vunpack.c.l.b16 %v66
    %v137 = vunpack.c.h.b16 %v66
    %v138 = vunpack.c.l.b16 %v67
    %v139 = vunpack.c.h.b16 %v67
    %v140 = vunpack.c.l.b16 %v68
    %v141 = vunpack.c.h.b16 %v68
    %v142 = vunpack.c.l.b16 %v69
    %v143 = vunpack.c.h.b16 %v69
    %v144 = vunpack.c.l.b16 %v70
    %v145 = vunpack.c.h.b16 %v70
    %v146 = vunpack.c.l.b16 %v71
    %v147 = vunpack.c.h.b16 %v71
    %v148 = vunpack.c.l.b16 %v72
    %v149 = vunpack.c.h.b16 %v72
    %v150 = vunpack.c.l.b16 %v73
    %v151 = vunpack.c.h.b16 %v73
    %v152 = vunpack.c.l.b16 %v74
    %v153 = vunpack.c.h.b16 %v74
    %v154 = vunpack.c.l.b16 %v75
    %v155 = vunpack.c.h.b16 %v75
    %v156 = vunpack.c.l.b16 %v76
    %v157 = vunpack.c.h.b16 %v76
    %v158 = vunpack.c.l.b16 %v77
    %v159 = vunpack.c.h.b16 %v77
    %v160 = vunpack.c.l.b16 %v78
    %v161 = vunpack.c.h.b16 %v78
    %v162 = vunpack.c.l.b16 %v79
    %v163 = vunpack.c.h.b16 %v79
    %v164 = vunpack.c.l.b16 %v80
    %v165 = vunpack.c.h.b16 %v80
    %v166 = vunpack.c.l.b16 %v81
    %v167 = vunpack.c.h.b16 %v81
    %v168 = vunpack.c.l.b16 %v82
    %v169 = vunpack.c.h.b16 %v82
    %v170 = vunpack.c.l.b16 %v83
    %v171 = vunpack.c.h.b16 %v83
    %v172 = vunpack.c.l.b16 %v84
    %v173 = vunpack.c.h.b16 %v84
    %v174 = vunpack.c.l.b16 %v85
    %v175 = vunpack.c.h.b16 %v85
    %v176 = vunpack.c.l.b16 %v86
    %v177 = vunpack.c.h.b16 %v86
    %v178 = vunpack.c.l.b16 %v87
    %v179 = vunpack.c.h.b16 %v87
    %v180 = vunpack.c.l.b16 %v88
    %v181 = vunpack.c.h.b16 %v88
    %v182 = vunpack.c.l.b16 %v89
    %v183 = vunpack.c.h.b16 %v89
    %v184 = vunpack.c.l.b16 %v90
    %v185 = vunpack.c.h.b16 %v90
    %v186 = vunpack.c.l.b16 %v91
    %v187 = vunpack.c.h.b16 %v91
    %v188 = vpack.c.b16 %v126, %v124
    %v189 = vpack.c.b16 %v127, %v125
    %v190 = vpack.c.b16 %v130, %v128
    %v191 = vpack.c.b16 %v131, %v129
    %v192 = vpack.c.b16 %v134, %v132
    %v193 = vpack.c.b16 %v135, %v133
    %v194 = vpack.c.b16 %v138, %v136
    %v195 = vpack.c.b16 %v139, %v137
    %v196 = vpack.c.b16 %v142, %v140
    %v197 = vpack.c.b16 %v143, %v141
    %v198 = vpack.c.b16 %v146, %v144
    %v199 = vpack.c.b16 %v147, %v145
    %v200 = vpack.c.b16 %v150, %v148
    %v201 = vpack.c.b16 %v151, %v149
    %v202 = vpack.c.b16 %v154, %v152
    %v203 = vpack.c.b16 %v155, %v153
    %v204 = vpack.c.b16 %v158, %v156
    %v205 = vpack.c.b16 %v159, %v157
    %v206 = vpack.c.b16 %v162, %v160
    %v207 = vpack.c.b16 %v163, %v161
    %v208 = vpack.c.b16 %v166, %v164
    %v209 = vpack.c.b16 %v167, %v165
    %v210 = vpack.c.b16 %v170, %v168
    %v211 = vpack.c.b16 %v171, %v169
    %v212 = vpack.c.b16 %v174, %v172
    %v213 = vpack.c.b16 %v175, %v173
    %v214 = vpack.c.b16 %v178, %v176
    %v215 = vpack.c.b16 %v179, %v177
    %v216 = vpack.c.b16 %v182, %v180
    %v217 = vpack.c.b16 %v183, %v181
    %v218 = vpack.c.b16 %v186, %v184
    %v219 = vpack.c.b16 %v187, %v185
    %252 = vmatprep.subr.bf16.mxu0 %v189
    %253 = vmatpush1.bf16.msra.mxu0 %v188
    %254 = vmatprep.subr.bf16.mxu0 %v191
    %255 = vmatpush1.bf16.msra.mxu0 %v190
    %256 = vmatprep.subr.bf16.mxu0 %v193
    %257 = vmatpush1.bf16.msra.mxu0 %v192
    %258 = vmatprep.subr.bf16.mxu0 %v195
    %259 = vmatpush1.bf16.msra.mxu0 %v194
    %260 = vmatprep.subr.bf16.mxu0 %v197
    %261 = vmatpush1.bf16.msra.mxu0 %v196
    %262 = vmatprep.subr.bf16.mxu0 %v199
    %263 = vmatpush1.bf16.msra.mxu0 %v198
    %264 = vmatprep.subr.bf16.mxu0 %v201
    %265 = vmatpush1.bf16.msra.mxu0 %v200
    %266 = vmatprep.subr.bf16.mxu0 %v203
    %267 = vmatpush1.bf16.msra.mxu0 %v202
    %268 = vmatprep.subr.bf16.mxu0 %v205
    %269 = vmatpush1.bf16.msra.mxu0 %v204
    %270 = vmatprep.subr.bf16.mxu0 %v207
    %271 = vmatpush1.bf16.msra.mxu0 %v206
    %272 = vmatprep.subr.bf16.mxu0 %v209
    %273 = vmatpush1.bf16.msra.mxu0 %v208
    %274 = vmatprep.subr.bf16.mxu0 %v211
    %275 = vmatpush1.bf16.msra.mxu0 %v210
    %276 = vmatprep.subr.bf16.mxu0 %v213
    %277 = vmatpush1.bf16.msra.mxu0 %v212
    %278 = vmatprep.subr.bf16.mxu0 %v215
    %279 = vmatpush1.bf16.msra.mxu0 %v214
    %280 = vmatprep.subr.bf16.mxu0 %v217
    %281 = vmatpush1.bf16.msra.mxu0 %v216
    %282 = vmatprep.subr.bf16.mxu0 %v219
    %283 = vmatpush1.bf16.msra.mxu0 %v218
    %284 = vmatprep.mubr.bf16.mxu0 %v59
    %285 = vmatmul.mubr.bf16.gmra.mrb[0].mxu0 %v58
    %v286 = vpop.f32.mrb[0].mxu0
    %v287 = vadd.f32 0.0, %v286
    %v288 = vpop.f32.mrb[0].mxu0
    %v289 = vadd.f32 0.0, %v288
    %v290 = vpop.f32.mrb[0].mxu0
    %v291 = vpop.f32.mrb[0].mxu0
    %292 = vdwg.mxu0
    %v293 = vsub.f32 %v56, %v287
    %v294 = vsub.f32 %v57, %v289
    %v295 = vmul.f32 %v293, %v293
    %v296 = vmul.f32 %v294, %v294
    %v297 = vadd.f32 %v295, 1e-06
    %v298 = vadd.f32 %v296, 1e-06
    %v299 = vrsqrt.pop %v297
    %v300 = vmul.f32 %v297, %v299
    %vm301 = vcmp.eq.f32.partialorder %v297, inf
    %v302 = vsel %vm301, %v297, %v300
    %vm303 = vcmp.eq.f32.partialorder %v297, 0.0
    %v304 = vand.u32 %v297, 2147483648
    %v305 = vsel %vm303, %v304, %v302
    %v306 = vrsqrt.pop %v298
    %v307 = vmul.f32 %v298, %v306
    %vm308 = vcmp.eq.f32.partialorder %v298, inf
    %v309 = vsel %vm308, %v298, %v307
    %vm310 = vcmp.eq.f32.partialorder %v298, 0.0
    %v311 = vand.u32 %v298, 2147483648
    %v312 = vsel %vm310, %v311, %v309
    %vm313 = vcmask 1045504
    %v314 = vsel %vm313, %v305, 0.0
    %v315 = vsel %vm313, %v312, 0.0
    %v316 = vadd.f32 %v314, %v315
    %317 = vadd.xlane.f32.xlu0 %v316
    %v318 = vpop.xlane.xlu0 %317
    %v319 = vrot.slane %v318, 4
    %v320 = vadd.f32 %v318, %v319
    %v321 = vrot.slane %v320, 2
    %v322 = vadd.f32 %v320, %v321
    %v323 = vrot.slane %v322, 1
    %v324 = vadd.f32 %v322, %v323
    %s325 = vtos %v324
    %v326 = vstv %s325
    %327 = vst [vmem:[#allocation8] sm:$0xff] %v326
    // Predicated region
    $region26: #{tpu_custom_call.1} parent=1 // pred_check
      _
    $region27: #{tpu_custom_call.1} parent=1 // pred_check_branch
      %329 = sbr.rel (0) target = $region29
    $region28: #{tpu_custom_call.1} parent=1 // pred_region
      %s331 = ssub.s32 128, 128
      %332 = vsyncadd [#allocation4], %s331
      %s334 = sshll.u32 [#allocation8], 4
      %s335 = int_to_ptr.vmem [resolvable:$true] %s334
      %337 = dma.vmem_to_hbm [thread:$0]  %s335, 128, %s3, [#allocation4]
    $region29: #{tpu_custom_call.1} parent=1 // pred_fallthru
      _
    // Predicated region
    $region30: #{tpu_custom_call.1} parent=1 // pred_check
      _
    $region31: #{tpu_custom_call.1} parent=1 // pred_check_branch
      %339 = sbr.rel (0) target = $region33
    $region32: #{tpu_custom_call.1} parent=1 // pred_region
      %340 = dma.done [#allocation4], 128
    $region33: #{tpu_custom_call.1} parent=1 // pred_fallthru
      _
    %341 = vsyncpa [#allocation3], 1
    %342 = vsyncpa [#allocation6], 1
    %343 = vsyncpa [#allocation4], 1

</llo_original>
